<compile_context>
chip_gen: v7x
topology: tpu7x:2x2x1
jax: 0.10.0
libtpu: 0.0.40
codegen_flags: <defaults>
</compile_context>

<pallas_src>
import functools

import jax
import jax.numpy as jnp
from jax.experimental import pallas as pl
from jax.experimental.pallas import tpu as pltpu

_EPS = 1e-30  # keeps rsqrt finite for an exactly-zero row; invisible otherwise.


def _contrastive_loss_kernel(x_ref, y_ref, out_ref, *, margin, inv_temperature,
                             use_bf16_mxu):
    i = pl.program_id(0)  # row-tile index
    j = pl.program_id(1)  # col-tile index

    @pl.when(jnp.logical_and(i == 0, j == 0))
    def _init():
        out_ref[0, 0] = 0.0

    x = x_ref[...].astype(jnp.float32)  # (tile, D)
    y = y_ref[...].astype(jnp.float32)  # (tile, D)

    # Raw pairwise dot products on the MXU; contraction on the last dim so no
    # explicit transpose is materialized.  bf16 operands, f32 accumulation.
    if use_bf16_mxu:
        a, b = x.astype(jnp.bfloat16), y.astype(jnp.bfloat16)
    else:
        a, b = x, y
    s = jax.lax.dot_general(
        a, b,
        dimension_numbers=(((1,), (1,)), ((), ())),
        preferred_element_type=jnp.float32,
    )  # (tile, tile)

    # Post-matmul normalization (all f32): cosine = S * row_inv * col_inv.
    x_inv = jax.lax.rsqrt(jnp.sum(x * x, axis=-1, keepdims=True) + _EPS)  # (tile, 1)
    y_inv = jax.lax.rsqrt(jnp.sum(y * y, axis=-1, keepdims=True) + _EPS)  # (tile, 1)
    cosine = s * x_inv * y_inv.reshape(1, -1)  # (tile, tile)

    # Hinge term summed over the whole tile (the diagonal's wrong contribution
    # is corrected below, only on diagonal tiles).
    block_sum = jnp.sum(jnp.maximum(-cosine - margin, 0.0))
    out_ref[0, 0] += block_sum * inv_temperature

    @pl.when(i == j)
    def _diag_correction():
        # diag_k = cos(x_k, y_k) via a row-wise VPU reduce (no (B, B) mask).
        diag = jnp.sum(x * y, axis=-1, keepdims=True) * x_inv * y_inv  # (tile, 1)
        corr = jnp.sum((1.0 - diag) - jnp.maximum(-diag - margin, 0.0))
        out_ref[0, 0] += corr * inv_temperature


def _pick_tile(b):
    # 256-aligned tiles match the v6e/v7x 2x256^2 MXU; 128 matches v5e's
    # 4x128^2.  Fall back to the full batch (single tile) for small/odd B.
    for t in (256, 128):
        if b % t == 0:
            return t
    return b


def custom_contrastive_loss(x, y, margin=0.5, temperature=0.07,
                            use_bf16_mxu=True):
    """x: (B, D) image embeddings, y: (B, D) text embeddings -> loss, shape (1,)."""
    assert x.shape == y.shape and x.ndim == 2
    B, D = x.shape
    x = x.astype(jnp.float32)
    y = y.astype(jnp.float32)

    tile = _pick_tile(B)
    grid = (B // tile, B // tile)

    # Match PyTorch truthiness: temperature == 0 (falsy) -> no division.
    inv_temperature = (1.0 / float(temperature)) if temperature else 1.0

    kernel = functools.partial(
        _contrastive_loss_kernel,
        margin=float(margin),
        inv_temperature=float(inv_temperature),
        use_bf16_mxu=bool(use_bf16_mxu),
    )

    # Rough per-step VMEM footprint: two double-buffered f32 input tiles plus
    # the (tile, tile) cosine / temporaries; clamp into [32 MiB, 60 MiB] so it
    # is above the default scoped limit yet safe on v7x's 64 MiB VMEM.
    per_step = 2 * (2 * tile * D * 4) + 4 * tile * tile * 4
    vmem_limit = int(min(max(2 * per_step, 32 * 1024 * 1024), 60 * 1024 * 1024))

    cost = pl.CostEstimate(
        flops=2 * B * B * D + 8 * B * B,
        transcendentals=2 * B,
        bytes_accessed=2 * B * D * 4 + 4,
    )

    out = pl.pallas_call(
        kernel,
        out_shape=jax.ShapeDtypeStruct((1, 1), jnp.float32),
        grid=grid,
        in_specs=[
            pl.BlockSpec((tile, D), lambda i, j: (i, 0)),  # x row-tile, resident over j
            pl.BlockSpec((tile, D), lambda i, j: (j, 0)),  # y col-tile
        ],
        out_specs=pl.BlockSpec(memory_space=pltpu.MemorySpace.SMEM),
        compiler_params=pltpu.CompilerParams(
            dimension_semantics=("arbitrary", "arbitrary"),
            vmem_limit_bytes=vmem_limit,
        ),
        cost_estimate=cost,
    )(x, y)
    return out.reshape(1)  # matches torch.sum(loss.view(1, -1), dim=-1) -> (1,)


if __name__ == "__main__":
    key = jax.random.PRNGKey(0)
    kx, ky = jax.random.split(key)
    batch, embed_dim = 8, 32
    x = jax.random.normal(kx, (batch, embed_dim), dtype=jnp.float32)
    y = jax.random.normal(ky, (batch, embed_dim), dtype=jnp.float32)

    margin, temperature = 0.5, 0.07
    loss = custom_contrastive_loss(x, y, margin=margin, temperature=temperature)
    jax.block_until_ready(loss)

    # Reference in plain JAX (f32 everywhere), same semantics as the PyTorch module.
    xn = x / jnp.linalg.norm(x, axis=-1, keepdims=True)
    yn = y / jnp.linalg.norm(y, axis=-1, keepdims=True)
    cos = xn @ yn.T
    lbl = jnp.eye(batch, dtype=jnp.float32)
    ref_loss = lbl * (1.0 - cos) + (1.0 - lbl) * jnp.maximum(-cos - margin, 0.0)
    if temperature:
        ref_loss = ref_loss / temperature
    ref = jnp.sum(ref_loss)

    # bf16 MXU operands -> ~1e-2 relative precision on the cosine values.
    assert jnp.allclose(loss[0], ref, rtol=3e-2, atol=3e-2), (loss, ref)

    print("KERNEL_OK")
</pallas_src>

<mosaic_0001>
module attributes {stable_mosaic.version = 11 : i64} {
  func.func @_contrastive_loss_kernel(%arg0: i32, %arg1: i32, %arg2: memref<8x32xf32, #tpu.memory_space<vmem>>, %arg3: memref<8x32xf32, #tpu.memory_space<vmem>>, %arg4: memref<1x1xf32, #tpu.memory_space<smem>>) attributes {dimension_semantics = [#tpu.dimension_semantics<arbitrary>, #tpu.dimension_semantics<arbitrary>], iteration_bounds = array<i64: 1, 1>, scalar_prefetch = 0 : i64, scratch_operands = 0 : i64, tpu.core_type = #tpu.core_type<tc>, window_params = [{transform_indices = @transform_0, window_bounds = array<i64: 8, 32>}, {transform_indices = @transform_1, window_bounds = array<i64: 8, 32>}, {transform_indices = @transform_2, window_bounds = array<i64: 1, 1>}]} {
    %c0_i32 = arith.constant 0 : i32
    %0 = arith.cmpi eq, %arg0, %c0_i32 : i32
    %c0_i32_0 = arith.constant 0 : i32
    %1 = arith.cmpi eq, %arg1, %c0_i32_0 : i32
    %2 = arith.andi %0, %1 : i1
    %3 = arith.extui %2 : i1 to i32
    %c0_i32_1 = arith.constant 0 : i32
    %4 = arith.cmpi ne, %3, %c0_i32_1 : i32
    scf.if %4 {
      %cst_19 = arith.constant 0.000000e+00 : f32
      %c0_20 = arith.constant 0 : index
      %c0_21 = arith.constant 0 : index
      %44 = memref.load %arg4[%c0_20, %c0_21] : memref<1x1xf32, #tpu.memory_space<smem>>
      memref.store %cst_19, %arg4[%c0_20, %c0_21] : memref<1x1xf32, #tpu.memory_space<smem>>
    } else {
    }
    %c0 = arith.constant 0 : index
    %c0_2 = arith.constant 0 : index
    %5 = vector.load %arg2[%c0, %c0_2] : memref<8x32xf32, #tpu.memory_space<vmem>>, vector<8x32xf32>
    %c0_3 = arith.constant 0 : index
    %c0_4 = arith.constant 0 : index
    %6 = vector.load %arg3[%c0_3, %c0_4] : memref<8x32xf32, #tpu.memory_space<vmem>>, vector<8x32xf32>
    %7 = arith.truncf %5 : vector<8x32xf32> to vector<8x32xbf16>
    %8 = arith.truncf %6 : vector<8x32xf32> to vector<8x32xbf16>
    %cst = arith.constant dense<0.000000e+00> : vector<8x8xf32>
    %9 = tpu.matmul %7, %8, %cst {dimension_numbers = #tpu.dot_dimension_numbers<[1], [1], [0], [0], [0, 0, 1, 0], [], []>} : vector<8x32xbf16>, vector<8x32xbf16>, vector<8x8xf32> -> vector<8x8xf32>
    %10 = arith.mulf %5, %5 : vector<8x32xf32>
    %cst_5 = arith.constant dense<0.000000e+00> : vector<8xf32>
    %11 = vector.multi_reduction <add>, %10, %cst_5 [1] : vector<8x32xf32> to vector<8xf32>
    %12 = vector.shape_cast %11 : vector<8xf32> to vector<8x1xf32>
    %cst_6 = arith.constant 1.000000e-30 : f32
    %13 = vector.broadcast %cst_6 : f32 to vector<8x1xf32>
    %14 = arith.addf %12, %13 : vector<8x1xf32>
    %15 = math.rsqrt %14 : vector<8x1xf32>
    %16 = arith.mulf %6, %6 : vector<8x32xf32>
    %cst_7 = arith.constant dense<0.000000e+00> : vector<8xf32>
    %17 = vector.multi_reduction <add>, %16, %cst_7 [1] : vector<8x32xf32> to vector<8xf32>
    %18 = vector.shape_cast %17 : vector<8xf32> to vector<8x1xf32>
    %cst_8 = arith.constant 1.000000e-30 : f32
    %19 = vector.broadcast %cst_8 : f32 to vector<8x1xf32>
    %20 = arith.addf %18, %19 : vector<8x1xf32>
    %21 = math.rsqrt %20 : vector<8x1xf32>
    %22 = vector.broadcast %15 : vector<8x1xf32> to vector<8x8xf32>
    %23 = arith.mulf %9, %22 : vector<8x8xf32>
    %24 = vector.shape_cast %21 : vector<8x1xf32> to vector<1x8xf32>
    %25 = vector.broadcast %24 : vector<1x8xf32> to vector<8x8xf32>
    %26 = arith.mulf %23, %25 : vector<8x8xf32>
    %cst_9 = arith.constant 0.000000e+00 : f32
    %27 = vector.broadcast %cst_9 : f32 to vector<8x8xf32>
    %28 = arith.subf %27, %26 : vector<8x8xf32>
    %cst_10 = arith.constant 5.000000e-01 : f32
    %29 = vector.broadcast %cst_10 : f32 to vector<8x8xf32>
    %30 = arith.subf %28, %29 : vector<8x8xf32>
    %cst_11 = arith.constant 0.000000e+00 : f32
    %31 = vector.broadcast %cst_11 : f32 to vector<8x8xf32>
    %32 = arith.maximumf %30, %31 : vector<8x8xf32>
    %33 = vector.shape_cast %32 : vector<8x8xf32> to vector<1x8x8xf32>
    %cst_12 = arith.constant dense<0.000000e+00> : vector<1xf32>
    %34 = vector.multi_reduction <add>, %33, %cst_12 [1, 2] : vector<1x8x8xf32> to vector<1xf32>
    %35 = vector.shape_cast %34 : vector<1xf32> to vector<1x1x1xf32>
    %36 = vector.extract %35[0, 0, 0] : f32 from vector<1x1x1xf32>
    %c0_13 = arith.constant 0 : index
    %c0_14 = arith.constant 0 : index
    %37 = memref.load %arg4[%c0_13, %c0_14] : memref<1x1xf32, #tpu.memory_space<smem>>
    %cst_15 = arith.constant 14.2857141 : f32
    %38 = arith.mulf %36, %cst_15 : f32
    %39 = arith.addf %37, %38 : f32
    %c0_16 = arith.constant 0 : index
    %c0_17 = arith.constant 0 : index
    %40 = memref.load %arg4[%c0_16, %c0_17] : memref<1x1xf32, #tpu.memory_space<smem>>
    memref.store %39, %arg4[%c0_16, %c0_17] : memref<1x1xf32, #tpu.memory_space<smem>>
    %41 = arith.cmpi eq, %arg0, %arg1 : i32
    %42 = arith.extui %41 : i1 to i32
    %c0_i32_18 = arith.constant 0 : i32
    %43 = arith.cmpi ne, %42, %c0_i32_18 : i32
    scf.if %43 {
      %44 = arith.mulf %5, %6 : vector<8x32xf32>
      %cst_19 = arith.constant dense<0.000000e+00> : vector<8xf32>
      %45 = vector.multi_reduction <add>, %44, %cst_19 [1] : vector<8x32xf32> to vector<8xf32>
      %46 = vector.shape_cast %45 : vector<8xf32> to vector<8x1xf32>
      %47 = arith.mulf %46, %15 : vector<8x1xf32>
      %48 = arith.mulf %47, %21 : vector<8x1xf32>
      %cst_20 = arith.constant 1.000000e+00 : f32
      %49 = vector.broadcast %cst_20 : f32 to vector<8x1xf32>
      %50 = arith.subf %49, %48 : vector<8x1xf32>
      %cst_21 = arith.constant 0.000000e+00 : f32
      %51 = vector.broadcast %cst_21 : f32 to vector<8x1xf32>
      %52 = arith.subf %51, %48 : vector<8x1xf32>
      %cst_22 = arith.constant 5.000000e-01 : f32
      %53 = vector.broadcast %cst_22 : f32 to vector<8x1xf32>
      %54 = arith.subf %52, %53 : vector<8x1xf32>
      %cst_23 = arith.constant 0.000000e+00 : f32
      %55 = vector.broadcast %cst_23 : f32 to vector<8x1xf32>
      %56 = arith.maximumf %54, %55 : vector<8x1xf32>
      %57 = arith.subf %50, %56 : vector<8x1xf32>
      %58 = vector.shape_cast %57 : vector<8x1xf32> to vector<1x8x1xf32>
      %cst_24 = arith.constant dense<0.000000e+00> : vector<1xf32>
      %59 = vector.multi_reduction <add>, %58, %cst_24 [1, 2] : vector<1x8x1xf32> to vector<1xf32>
      %60 = vector.shape_cast %59 : vector<1xf32> to vector<1x1x1xf32>
      %61 = vector.extract %60[0, 0, 0] : f32 from vector<1x1x1xf32>
      %c0_25 = arith.constant 0 : index
      %c0_26 = arith.constant 0 : index
      %62 = memref.load %arg4[%c0_25, %c0_26] : memref<1x1xf32, #tpu.memory_space<smem>>
      %cst_27 = arith.constant 14.2857141 : f32
      %63 = arith.mulf %61, %cst_27 : f32
      %64 = arith.addf %62, %63 : f32
      %c0_28 = arith.constant 0 : index
      %c0_29 = arith.constant 0 : index
      %65 = memref.load %arg4[%c0_28, %c0_29] : memref<1x1xf32, #tpu.memory_space<smem>>
      memref.store %64, %arg4[%c0_28, %c0_29] : memref<1x1xf32, #tpu.memory_space<smem>>
    } else {
    }
    return
  }
  func.func @transform_0(%arg0: i32, %arg1: i32) -> (i32, i32) {
    %c0_i32 = arith.constant 0 : i32
    %c0_i32_0 = arith.constant 0 : i32
    return %arg0, %c0_i32 : i32, i32
  }
  func.func @transform_1(%arg0: i32, %arg1: i32) -> (i32, i32) {
    %c0_i32 = arith.constant 0 : i32
    %c0_i32_0 = arith.constant 0 : i32
    return %arg1, %c0_i32 : i32, i32
  }
  func.func @transform_2(%arg0: i32, %arg1: i32) -> (i32, i32) {
    %c0_i32 = arith.constant 0 : i32
    %c0_i32_0 = arith.constant 0 : i32
    %c0_i32_1 = arith.constant 0 : i32
    return %c0_i32, %c0_i32_0 : i32, i32
  }
}

</mosaic_0001>

<llo_original>
// kernel: tpu_custom_call.1
$region0: #{tpu_custom_call.1}
  #allocation0 [shape = 'u32[]', space=smem, size = 0x4, offset = 0x4, fixed_abs, tag = 'smem constant byte address 0x4 - core index']
  #allocation1 [shape = 'u32[144,128]{1,0:T(1,128)}', space=vmem, size = 0x12000, scoped, tag = 'internal scratch']
  %s0 = inlined_call_operand.hbm [shape: f32[8,32], index: 0, kind: input, shape index: {}]
  %s1 = inlined_call_operand.hbm [shape: f32[8,32], index: 1, kind: input, shape index: {}]
  %s2 = inlined_call_operand.hbm [shape: f32[1,1], index: 2, kind: output, shape index: {}]
  %s3 = sld [smem:[#allocation0]]
  $region34: #{tpu_custom_call.1} parent=0
    _
  %s5 = ssub.s32 1, %s3
  %s6 = scalar_select 0, %s5, %s3
  $region1: #{tpu_custom_call.1} parent=0
    #allocation2 [shape = 'u8[4096]{0}', space=vmem, size = 0x1000, scoped, tag = 'input window, operand 0, single buffered']
    #allocation3 [shape = 's32[1]{0}', space=sflag, size = 0x4, scoped, tag = 'scoped memory for tpu_custom_call.1']
    #allocation4 [shape = 's32[1]{0}', space=sflag, size = 0x4, scoped, tag = 'scoped memory for tpu_custom_call.1']
    #allocation5 [shape = 'u8[4096]{0}', space=vmem, size = 0x1000, scoped, tag = 'input window, operand 1, single buffered']
    #allocation6 [shape = 's32[1]{0}', space=sflag, size = 0x4, scoped, tag = 'scoped memory for tpu_custom_call.1']
    #allocation7 [shape = 'u8[512]{0}', space=smem, size = 0x200, scoped, tag = 'output window, operand 0, single buffered']
    %7 = vsyncpa [#allocation3], 0
    %8 = vsyncpa [#allocation6], 0
    %9 = vsyncpa [#allocation4], 0
    // Predicated region
    $region2: #{tpu_custom_call.1} parent=1 // pred_check
      _
    $region3: #{tpu_custom_call.1} parent=1 // pred_check_branch
      %11 = sbr.rel (0) target = $region5
    $region4: #{tpu_custom_call.1} parent=1 // pred_region
      %s13 = ssub.s32 128, 128
      %14 = vsyncadd [#allocation3], %s13
      %s16 = sshll.u32 [#allocation2], 4
      %s17 = int_to_ptr.vmem [resolvable:$true] %s16
      %19 = dma.hbm_to_vmem [thread:$0]  %s0, 128, %s17, [#allocation3]
    $region5: #{tpu_custom_call.1} parent=1 // pred_fallthru
      _
    // Predicated region
    $region6: #{tpu_custom_call.1} parent=1 // pred_check
      _
    $region7: #{tpu_custom_call.1} parent=1 // pred_check_branch
      %21 = sbr.rel (0) target = $region9
    $region8: #{tpu_custom_call.1} parent=1 // pred_region
      %s23 = ssub.s32 128, 128
      %24 = vsyncadd [#allocation6], %s23
      %s26 = sshll.u32 [#allocation5], 4
      %s27 = int_to_ptr.vmem [resolvable:$true] %s26
      %29 = dma.hbm_to_vmem [thread:$0]  %s1, 128, %s27, [#allocation6]
    $region9: #{tpu_custom_call.1} parent=1 // pred_fallthru
      _
    // Predicated region
    $region10: #{tpu_custom_call.1} parent=1 // pred_check
      _
    $region11: #{tpu_custom_call.1} parent=1 // pred_check_branch
      %31 = sbr.rel (0) target = $region13
    $region12: #{tpu_custom_call.1} parent=1 // pred_region
      %32 = dma.done [#allocation3], 128
    $region13: #{tpu_custom_call.1} parent=1 // pred_fallthru
      _
    // Predicated region
    $region14: #{tpu_custom_call.1} parent=1 // pred_check
      _
    $region15: #{tpu_custom_call.1} parent=1 // pred_check_branch
      %34 = sbr.rel (0) target = $region17
    $region16: #{tpu_custom_call.1} parent=1 // pred_region
      %35 = dma.done [#allocation6], 128
    $region17: #{tpu_custom_call.1} parent=1 // pred_fallthru
      _
    %p37 = scmp.eq.s32.totalorder 0, 0
    %p38 = scmp.eq.s32.totalorder 0, 0
    %p39 = pnand %p37, %p38
    %p40 = pneg %p39
    // Predicated region
    $region18: #{tpu_custom_call.1} parent=1 // pred_check
      _
    $region19: #{tpu_custom_call.1} parent=1 // pred_check_branch
      %42 = sbr.rel (%p39) target = $region21
    $region20: #{tpu_custom_call.1} parent=1 // pred_region
      %s43 = scalar_lea.smem [#allocation7], 0
      %44 = sst [smem:[%s43]] 0.0
    $region21: #{tpu_custom_call.1} parent=1 // pred_fallthru
      _
    %v45 = vld [vmem:[#allocation2] sm:$0xff]
    %v46 = vld [vmem:[#allocation5] sm:$0xff]
    %v47 = vpack.c.bf16 %v45, %v45
    %v48 = vpack.c.bf16 %v46, %v46
    %vm49 = vcmask 261120
    %v51 = vsel %vm49, %v47, 0
    %v54 = vsel %vm49, %v48, 0
    %56 = vmatprep.subr.bf16.mxu0 0
    %57 = vmatpush1.bf16.xpose.msra.mxu0 %v54
    %58 = vmatprep.subr.bf16.mxu0 0
    %59 = vmatpush1.bf16.xpose.msra.mxu0 0
    %60 = vmatprep.subr.bf16.mxu0 0
    %61 = vmatpush1.bf16.xpose.msra.mxu0 0
    %62 = vmatprep.subr.bf16.mxu0 0
    %63 = vmatpush1.bf16.xpose.msra.mxu0 0
    %64 = vmatprep.subr.bf16.mxu0 0
    %65 = vmatpush1.bf16.xpose.msra.mxu0 0
    %66 = vmatprep.subr.bf16.mxu0 0
    %67 = vmatpush1.bf16.xpose.msra.mxu0 0
    %68 = vmatprep.subr.bf16.mxu0 0
    %69 = vmatpush1.bf16.xpose.msra.mxu0 0
    %70 = vmatprep.subr.bf16.mxu0 0
    %71 = vmatpush1.bf16.xpose.msra.mxu0 0
    %72 = vmatprep.subr.bf16.mxu0 0
    %73 = vmatpush1.bf16.xpose.msra.mxu0 0
    %74 = vmatprep.subr.bf16.mxu0 0
    %75 = vmatpush1.bf16.xpose.msra.mxu0 0
    %76 = vmatprep.subr.bf16.mxu0 0
    %77 = vmatpush1.bf16.xpose.msra.mxu0 0
    %78 = vmatprep.subr.bf16.mxu0 0
    %79 = vmatpush1.bf16.xpose.msra.mxu0 0
    %80 = vmatprep.subr.bf16.mxu0 0
    %81 = vmatpush1.bf16.xpose.msra.mxu0 0
    %82 = vmatprep.subr.bf16.mxu0 0
    %83 = vmatpush1.bf16.xpose.msra.mxu0 0
    %84 = vmatprep.subr.bf16.mxu0 0
    %85 = vmatpush1.bf16.xpose.msra.mxu0 0
    %86 = vmatprep.subr.bf16.mxu0 0
    %87 = vmatpush1.bf16.xpose.msra.mxu0 0
    %88 = vmatprep.mubr.bf16.mxu0 0
    %89 = vmatmul.mubr.bf16.gmra.mrb[0].mxu0 %v51
    %v90 = vpop.f32.mrb[0].mxu0
    %v91 = vadd.f32 0.0, %v90
    %v92 = vpop.f32.mrb[0].mxu0
    %v93 = vpop.f32.mrb[0].mxu0
    %v94 = vpop.f32.mrb[0].mxu0
    %95 = vdwg.mxu0
    %v96 = vmul.f32 %v45, %v45
    %v97 = vsel %vm49, %v96, 0.0
    %98 = vadd.xlane.f32.xlu0 %v97
    %v99 = vpop.xlane.xlu0 %98
    %v100 = vadd.f32 %v99, 1e-30
    %v101 = vrsqrt.pop %v100
    %v102 = vmul.f32 %v46, %v46
    %v103 = vsel %vm49, %v102, 0.0
    %104 = vadd.xlane.f32.xlu0 %v103
    %v105 = vpop.xlane.xlu0 %104
    %v106 = vadd.f32 %v105, 1e-30
    %v107 = vrsqrt.pop %v106
    %v108 = vmul.f32 %v91, %v101
    %v110 = vlaneseq
    %v111 = vand.u32 %v110, 127
    %v112 = vlaneseq
    %v113 = vshrl.u32 %v112, 7
    %v114 = vsub.s32 %v111, %v113
    %v115 = vrot.slane %v107, %v114
    %vm116 = vcmask 1042434
    %v117 = vsel %vm116, %v115, %v115
    %vm118 = vcmask 1043459
    %v119 = vsel %vm118, %v115, %v117
    %vm120 = vcmask 1044484
    %v121 = vsel %vm120, %v115, %v119
    %vm122 = vcmask 1045509
    %v123 = vsel %vm122, %v115, %v121
    %vm124 = vcmask 1046534
    %v125 = vsel %vm124, %v115, %v123
    %vm126 = vcmask 1047559
    %v127 = vsel %vm126, %v115, %v125
    %v129 = vmul.f32 %v108, %v127
    %v130 = vsub.f32 0.0, %v129
    %v131 = vsub.f32 %v130, 0.5
    %v132 = vmax.f32 %v131, 0.0
    %vm133 = vcmask 64512
    %v134 = vsel %vm133, %v132, 0.0
    %135 = vadd.xlane.f32.xlu0 %v134
    %v136 = vpop.xlane.xlu0 %135
    %v137 = vrot.slane %v136, 4
    %v138 = vadd.f32 %v136, %v137
    %v139 = vrot.slane %v138, 2
    %v140 = vadd.f32 %v138, %v139
    %v141 = vrot.slane %v140, 1
    %v142 = vadd.f32 %v140, %v141
    %s143 = vtos %v142
    %s144 = sld [smem:[#allocation7]]
    %s145 = smul.f32 %s143, 14.285714
    %s146 = sadd.f32 %s144, %s145
    %s147 = scalar_lea.smem [#allocation7], 0
    %148 = sst [smem:[%s147]] %s146
    %p149 = scmp.eq.s32.totalorder 0, 0
    // Predicated region
    $region22: #{tpu_custom_call.1} parent=1 // pred_check
      %p150 = pneg %p149
    $region23: #{tpu_custom_call.1} parent=1 // pred_check_branch
      %152 = sbr.rel (%p150) target = $region25
    $region24: #{tpu_custom_call.1} parent=1 // pred_region
      %v153 = vmul.f32 %v45, %v46
      %v154 = vsel %vm49, %v153, 0.0
      %155 = vadd.xlane.f32.xlu0 %v154
      %v156 = vpop.xlane.xlu0 %155
      %v157 = vmul.f32 %v156, %v101
      %v158 = vmul.f32 %v157, %v107
      %v159 = vsub.f32 1.0, %v158
      %v160 = vsub.f32 0.0, %v158
      %v161 = vsub.f32 %v160, 0.5
      %v162 = vmax.f32 %v161, 0.0
      %v163 = vsub.f32 %v159, %v162
      %vm164 = vcmask 7168
      %v165 = vsel %vm164, %v163, 0.0
      %166 = vadd.xlane.f32.xlu0 %v165
      %v167 = vpop.xlane.xlu0 %166
      %v168 = vrot.slane %v167, 4
      %v169 = vadd.f32 %v167, %v168
      %v170 = vrot.slane %v169, 2
      %v171 = vadd.f32 %v169, %v170
      %v172 = vrot.slane %v171, 1
      %v173 = vadd.f32 %v171, %v172
      %s174 = vtos %v173
      %s175 = sld [smem:[#allocation7]]
      %s176 = smul.f32 %s174, 14.285714
      %s177 = sadd.f32 %s175, %s176
      %178 = sst [smem:[%s147]] %s177
    $region25: #{tpu_custom_call.1} parent=1 // pred_fallthru
      _
    // Predicated region
    $region26: #{tpu_custom_call.1} parent=1 // pred_check
      _
    $region27: #{tpu_custom_call.1} parent=1 // pred_check_branch
      %180 = sbr.rel (0) target = $region29
    $region28: #{tpu_custom_call.1} parent=1 // pred_region
      %s182 = ssub.s32 16, 16
      %183 = vsyncadd [#allocation4], %s182
      %186 = dma.smem_to_hbm [#allocation7], 16, %s2, [#allocation4]
    $region29: #{tpu_custom_call.1} parent=1 // pred_fallthru
      _
    // Predicated region
    $region30: #{tpu_custom_call.1} parent=1 // pred_check
      _
    $region31: #{tpu_custom_call.1} parent=1 // pred_check_branch
      %188 = sbr.rel (0) target = $region33
    $region32: #{tpu_custom_call.1} parent=1 // pred_region
      %189 = dma.done [#allocation4], 16
    $region33: #{tpu_custom_call.1} parent=1 // pred_fallthru
      _
    %190 = sfence
    %191 = vsyncpa [#allocation3], 1
    %192 = vsyncpa [#allocation6], 1
    %193 = vsyncpa [#allocation4], 1

</llo_original>
